<compile_context>
chip_gen: v5e
topology: v5e:2x2
jax: 0.10.0
libtpu: 0.0.40
codegen_flags: <defaults>
</compile_context>

<pallas_src>
import functools

import jax
import jax.numpy as jnp
from jax import lax
from jax.experimental import pallas as pl
from jax.experimental.pallas import tpu as pltpu


def _round_up(x, m):
    return ((x + m - 1) // m) * m


def mfm_kernel(x_ref, w_ref, b_ref, o_ref, *, Nb, H, K, Lpad, half):
    """One grid step = Nb batch images.

    x_ref : (Nb, Hp, Lpad)   bf16  padded input rows; lanes = (w_pad, c_in), zero lane-padded.
    w_ref : (K, Lpad, Ncol)  bf16  per-kh banded conv weights; columns ordered (half, w, c_out).
    b_ref : (1, Ncol)        f32   bias in the same column order (added post-matmul in f32).
    o_ref : (Nb, H, half)          lane-dense MFM output (NHWC memory order).
    """
    M = Nb * H
    # K accumulating MXU dots (one per kh tap) -- no (M, K*Lpad) im2col slab is ever
    # materialized in VMEM; the f32 adds are cheap VPU filler (free on v7x via the MRB).
    acc = jnp.dot(x_ref[:, 0:H, :].reshape(M, Lpad), w_ref[0],
                  preferred_element_type=jnp.float32)
    for kh in range(1, K):                       # static unroll (K = 3)
        acc = acc + jnp.dot(x_ref[:, kh:kh + H, :].reshape(M, Lpad), w_ref[kh],
                            preferred_element_type=jnp.float32)
    acc = acc + b_ref[...]                       # f32 bias (broadcast over M rows)
    # Max-Feature-Map: max of the two channel halves (vreg-aligned lane halves), in f32.
    out = jnp.maximum(acc[:, :half], acc[:, half:])
    o_ref[...] = out.reshape(o_ref.shape).astype(o_ref.dtype)


def pack_mfm_params(weight, bias, *, W, out_channels, kernel_size=3, padding=1):
    """Repack the OIHW conv weight into per-kh banded matmul weights and a column-ordered
    f32 bias row.  Hoisted out of the forward path -- call once at module init."""
    two_cout, C_in, K, K2 = weight.shape
    assert K == kernel_size and K2 == kernel_size
    C_out = out_channels
    assert two_cout == 2 * C_out
    assert bias.shape == (2 * C_out,)
    Wp = W + 2 * padding
    half = W * C_out
    Ncol = 2 * half
    Lpad = _round_up(Wp * C_in, 128)

    # W_kh[(j, ci), (s, w, d)] = weight[s*C_out + d, ci, kh, j - w]  (zero outside the band),
    # so the kw taps live in the weight and the in-kernel lhs only needs kh row shifts.
    wt = jnp.transpose(weight, (2, 3, 1, 0)).reshape(K, K, C_in, 2, C_out)   # (kh,kw,ci,s,d)
    kw_idx = jnp.arange(K)[:, None, None]
    j_idx = jnp.arange(Wp)[None, :, None]
    w_idx = jnp.arange(W)[None, None, :]
    sel = (j_idx == w_idx + kw_idx).astype(weight.dtype)                     # (K, Wp, W)
    wband = jnp.einsum("kqcsd,qjw->kjcswd", wt, sel)                         # (K,Wp,C_in,2,W,C_out)
    wband = wband.reshape(K, Wp * C_in, Ncol)
    w_packed = jnp.zeros((K, Lpad, Ncol), weight.dtype)
    w_packed = w_packed.at[:, :Wp * C_in, :].set(wband).astype(jnp.bfloat16)
    # Bias in the same (half, w, c_out) column order, kept f32 (added post-matmul in-kernel).
    bias_cols = jnp.broadcast_to(bias.reshape(2, 1, C_out), (2, W, C_out)).reshape(1, Ncol)
    bias_cols = bias_cols.astype(jnp.float32)
    # TODO(synk): at realistic LCNN widths (W >= 64) this banded weight is O(W^2*C_in*C_out)
    # and mostly structural zeros -- tile output columns into W-strips (or move kw taps into
    # the lhs with contraction K*K*C_in) before scaling past toy shapes.
    return w_packed, bias_cols


@functools.partial(jax.jit, static_argnames=("out_channels", "kernel_size", "padding"))
def mfm_forward(x_nchw, w_packed, bias_cols, *, out_channels, kernel_size=3, padding=1):
    """x_nchw: (N, C_in, H, W) -> (N, C_out, H, W);  conv(k=3, s=1, p=1) + MFM max."""
    N, C_in, H, W = x_nchw.shape
    K = kernel_size
    C_out = out_channels
    assert padding == (K - 1) // 2, "kernel assumes stride=1, 'same' padding"
    Hp, Wp = H + 2 * padding, W + 2 * padding
    half = W * C_out                                   # lanes per MFM half (128 here)
    Ncol = 2 * half
    Lpad = _round_up(Wp * C_in, 128)
    assert w_packed.shape == (K, Lpad, Ncol)
    assert bias_cols.shape == (1, Ncol)
    assert half % 128 == 0, "output columns must stay lane-dense (pad W*C_out otherwise)"

    # ---- wrapper layout glue (pure XLA, fused under jit) ----
    # NCHW -> NHWC, bf16 cast fused into the pad pass, spatial 'same' pad, fold (w, ci)
    # into lanes, lane-pad to Lpad.  (No constant-1 bias lane needed anymore.)
    x_nhwc = jnp.transpose(x_nchw, (0, 2, 3, 1)).astype(jnp.bfloat16)
    x_pad = jnp.pad(x_nhwc, ((0, 0), (padding, padding), (padding, padding), (0, 0)))
    x_flat = x_pad.reshape(N, Hp, Wp * C_in)
    x_flat = jnp.pad(x_flat, ((0, 0), (0, 0), (0, Lpad - Wp * C_in)))

    # Grid/batch blocking: fold the whole batch into one grid step (grid=1) unless
    # M = N*H is large enough that splitting across v7x's two TensorCores pays
    # (>= ~512 rows => >= 256 MXU rows per core).  Single-TC v5e/v6e always prefer grid=1
    # at small sizes (avoids the ~0.35us/step fixed overhead on an overhead-bound kernel).
    if N % 2 == 0 and N * H >= 512:
        Nb = N // 2
    else:
        Nb = N
    grid = N // Nb

    kernel = functools.partial(mfm_kernel, Nb=Nb, H=H, K=K, Lpad=Lpad, half=half)

    out_flat = pl.pallas_call(
        kernel,
        out_shape=jax.ShapeDtypeStruct((N, H, half), x_nchw.dtype),
        grid_spec=pltpu.PrefetchScalarGridSpec(
            num_scalar_prefetch=0,
            grid=(grid,),
            in_specs=[
                pl.BlockSpec((Nb, Hp, Lpad), lambda n: (n, 0, 0)),
                # Weight / bias blocks are grid-invariant (DMA'd once).
                # TODO(synk): when grid > 1 at real sizes, single-buffer these
                # (pipeline_mode=pl.Buffered(1)), add H-row strips with K-1 halo rows,
                # and set vmem_limit_bytes explicitly for v7x's 64 MiB VMEM.
                pl.BlockSpec((K, Lpad, Ncol), lambda n: (0, 0, 0)),
                pl.BlockSpec((1, Ncol), lambda n: (0, 0)),
            ],
            out_specs=pl.BlockSpec((Nb, H, half), lambda n: (n, 0, 0)),  # lane-dense (..,128)
        ),
        compiler_params=pltpu.CompilerParams(
            dimension_semantics=("parallel",)),
    )(x_flat, w_packed, bias_cols)

    # Layout plumbing back to NCHW (pure reshape/transpose, fused under jit).
    return out_flat.reshape(N, H, W, C_out).transpose(0, 3, 1, 2)


def mfm_reference(x_nchw, weight, bias, out_channels):
    """Pure-JAX reference matching the PyTorch module (for verification)."""
    y = lax.conv_general_dilated(
        x_nchw, weight, window_strides=(1, 1), padding=((1, 1), (1, 1)),
        dimension_numbers=("NCHW", "OIHW", "NCHW"))
    y = y + bias[None, :, None, None]
    return jnp.maximum(y[:, :out_channels], y[:, out_channels:])


if __name__ == "__main__":
    # Small shapes consistent with mfm(type=1): batch=2, in_channels=4, 16x16 spatial,
    # out_channels=8 (conv produces 16 channels before the MFM max).
    N, C_in, H, W = 2, 4, 16, 16
    C_out = 8
    K = 3

    key = jax.random.PRNGKey(0)
    kx, kw, kb = jax.random.split(key, 3)

    x = jax.random.normal(kx, (N, C_in, H, W), dtype=jnp.float32)
    # Deterministic synthetic parameters (shapes match nn.Conv2d(C_in, 2*C_out, 3, 1, 1)).
    fan_in = C_in * K * K
    bound = 1.0 / (fan_in ** 0.5)
    weight = jax.random.uniform(kw, (2 * C_out, C_in, K, K),
                                minval=-bound, maxval=bound, dtype=jnp.float32)
    bias = jax.random.uniform(kb, (2 * C_out,),
                              minval=-bound, maxval=bound, dtype=jnp.float32)

    # Weight repack is hoisted out of the forward path (module-init style, done once).
    w_packed, bias_cols = pack_mfm_params(weight, bias, W=W, out_channels=C_out,
                                          kernel_size=K, padding=1)
    w_packed, bias_cols = jax.block_until_ready((w_packed, bias_cols))

    out = mfm_forward(x, w_packed, bias_cols, out_channels=C_out, kernel_size=K, padding=1)
    out = jax.block_until_ready(out)

    ref = mfm_reference(x, weight, bias, C_out)
    assert out.shape == (N, C_out, H, W)
    # bf16 MXU operands with f32 accumulation (bias added in f32) vs f32 reference.
    assert jnp.allclose(out, ref, atol=2e-2, rtol=2e-2), "mismatch vs reference conv+MFM"

    print("KERNEL_OK")
</pallas_src>

<mosaic_0001>
module attributes {stable_mosaic.version = 11 : i64} {
  func.func @mfm_kernel(%arg0: i32, %arg1: memref<2x18x128xbf16, #tpu.memory_space<vmem>>, %arg2: memref<3x128x256xbf16, #tpu.memory_space<vmem>>, %arg3: memref<1x256xf32, #tpu.memory_space<vmem>>, %arg4: memref<2x16x128xf32, #tpu.memory_space<vmem>>) attributes {dimension_semantics = [#tpu.dimension_semantics<parallel>], iteration_bounds = array<i64: 1>, scalar_prefetch = 0 : i64, scratch_operands = 0 : i64, tpu.core_type = #tpu.core_type<tc>, window_params = [{transform_indices = @transform_0, window_bounds = array<i64: 2, 18, 128>}, {pipeline_mode = #tpu.pipeline_mode<synchronous>, transform_indices = @transform_1, window_bounds = array<i64: 3, 128, 256>}, {pipeline_mode = #tpu.pipeline_mode<synchronous>, transform_indices = @transform_2, window_bounds = array<i64: 1, 256>}, {transform_indices = @transform_3, window_bounds = array<i64: 2, 16, 128>}]} {
    %c0 = arith.constant 0 : index
    %c0_0 = arith.constant 0 : index
    %c0_1 = arith.constant 0 : index
    %0 = vector.load %arg1[%c0, %c0_0, %c0_1] : memref<2x18x128xbf16, #tpu.memory_space<vmem>>, vector<2x16x128xbf16>
    %1 = vector.shape_cast %0 : vector<2x16x128xbf16> to vector<32x128xbf16>
    %c0_2 = arith.constant 0 : index
    %c0_3 = arith.constant 0 : index
    %c0_4 = arith.constant 0 : index
    %2 = vector.load %arg2[%c0_2, %c0_3, %c0_4] : memref<3x128x256xbf16, #tpu.memory_space<vmem>>, vector<1x128x256xbf16>
    %3 = vector.shape_cast %2 : vector<1x128x256xbf16> to vector<128x256xbf16>
    %cst = arith.constant dense<0.000000e+00> : vector<32x256xf32>
    %4 = tpu.matmul %1, %3, %cst {dimension_numbers = #tpu.dot_dimension_numbers<[1], [0], [0], [1], [0, 0, 1, 1], [], []>} : vector<32x128xbf16>, vector<128x256xbf16>, vector<32x256xf32> -> vector<32x256xf32>
    %c0_5 = arith.constant 0 : index
    %c1 = arith.constant 1 : index
    %c0_6 = arith.constant 0 : index
    %5 = vector.load %arg1[%c0_5, %c1, %c0_6] : memref<2x18x128xbf16, #tpu.memory_space<vmem>>, vector<2x16x128xbf16>
    %6 = vector.shape_cast %5 : vector<2x16x128xbf16> to vector<32x128xbf16>
    %c1_7 = arith.constant 1 : index
    %c0_8 = arith.constant 0 : index
    %c0_9 = arith.constant 0 : index
    %7 = vector.load %arg2[%c1_7, %c0_8, %c0_9] : memref<3x128x256xbf16, #tpu.memory_space<vmem>>, vector<1x128x256xbf16>
    %8 = vector.shape_cast %7 : vector<1x128x256xbf16> to vector<128x256xbf16>
    %cst_10 = arith.constant dense<0.000000e+00> : vector<32x256xf32>
    %9 = tpu.matmul %6, %8, %cst_10 {dimension_numbers = #tpu.dot_dimension_numbers<[1], [0], [0], [1], [0, 0, 1, 1], [], []>} : vector<32x128xbf16>, vector<128x256xbf16>, vector<32x256xf32> -> vector<32x256xf32>
    %10 = arith.addf %4, %9 : vector<32x256xf32>
    %c0_11 = arith.constant 0 : index
    %c2 = arith.constant 2 : index
    %c0_12 = arith.constant 0 : index
    %11 = vector.load %arg1[%c0_11, %c2, %c0_12] : memref<2x18x128xbf16, #tpu.memory_space<vmem>>, vector<2x16x128xbf16>
    %12 = vector.shape_cast %11 : vector<2x16x128xbf16> to vector<32x128xbf16>
    %c2_13 = arith.constant 2 : index
    %c0_14 = arith.constant 0 : index
    %c0_15 = arith.constant 0 : index
    %13 = vector.load %arg2[%c2_13, %c0_14, %c0_15] : memref<3x128x256xbf16, #tpu.memory_space<vmem>>, vector<1x128x256xbf16>
    %14 = vector.shape_cast %13 : vector<1x128x256xbf16> to vector<128x256xbf16>
    %cst_16 = arith.constant dense<0.000000e+00> : vector<32x256xf32>
    %15 = tpu.matmul %12, %14, %cst_16 {dimension_numbers = #tpu.dot_dimension_numbers<[1], [0], [0], [1], [0, 0, 1, 1], [], []>} : vector<32x128xbf16>, vector<128x256xbf16>, vector<32x256xf32> -> vector<32x256xf32>
    %16 = arith.addf %10, %15 : vector<32x256xf32>
    %c0_17 = arith.constant 0 : index
    %c0_18 = arith.constant 0 : index
    %17 = vector.load %arg3[%c0_17, %c0_18] : memref<1x256xf32, #tpu.memory_space<vmem>>, vector<1x256xf32>
    %18 = vector.broadcast %17 : vector<1x256xf32> to vector<32x256xf32>
    %19 = arith.addf %16, %18 : vector<32x256xf32>
    %20 = vector.extract_strided_slice %19 {offsets = [0, 0], sizes = [32, 128], strides = [1, 1]} : vector<32x256xf32> to vector<32x128xf32>
    %21 = vector.extract_strided_slice %19 {offsets = [0, 128], sizes = [32, 128], strides = [1, 1]} : vector<32x256xf32> to vector<32x128xf32>
    %22 = arith.maximumf %20, %21 : vector<32x128xf32>
    %23 = vector.shape_cast %22 : vector<32x128xf32> to vector<2x16x128xf32>
    %c0_19 = arith.constant 0 : index
    %c0_20 = arith.constant 0 : index
    %c0_21 = arith.constant 0 : index
    %24 = vector.load %arg4[%c0_19, %c0_20, %c0_21] : memref<2x16x128xf32, #tpu.memory_space<vmem>>, vector<2x16x128xf32>
    tpu.vector_store %arg4[%c0_19, %c0_20, %c0_21], %23 {strides = array<i32>} : memref<2x16x128xf32, #tpu.memory_space<vmem>>, vector<2x16x128xf32>,
    return
  }
  func.func @transform_0(%arg0: i32) -> (i32, i32, i32) {
    %c0_i32 = arith.constant 0 : i32
    %c0_i32_0 = arith.constant 0 : i32
    %c0_i32_1 = arith.constant 0 : i32
    return %arg0, %c0_i32, %c0_i32_0 : i32, i32, i32
  }
  func.func @transform_1(%arg0: i32) -> (i32, i32, i32) {
    %c0_i32 = arith.constant 0 : i32
    %c0_i32_0 = arith.constant 0 : i32
    %c0_i32_1 = arith.constant 0 : i32
    %c0_i32_2 = arith.constant 0 : i32
    return %c0_i32, %c0_i32_0, %c0_i32_1 : i32, i32, i32
  }
  func.func @transform_2(%arg0: i32) -> (i32, i32) {
    %c0_i32 = arith.constant 0 : i32
    %c0_i32_0 = arith.constant 0 : i32
    %c0_i32_1 = arith.constant 0 : i32
    return %c0_i32, %c0_i32_0 : i32, i32
  }
  func.func @transform_3(%arg0: i32) -> (i32, i32, i32) {
    %c0_i32 = arith.constant 0 : i32
    %c0_i32_0 = arith.constant 0 : i32
    %c0_i32_1 = arith.constant 0 : i32
    return %arg0, %c0_i32, %c0_i32_0 : i32, i32, i32
  }
}

</mosaic_0001>

<llo_original>
// kernel: mfm_forward.1
$region0: #{mfm_forward.1}
  #allocation0 [shape = 'u32[]', space=smem, size = 0x4, offset = 0x4, fixed_abs, tag = 'smem constant byte address 0x4 - core index']
  #allocation1 [shape = 'u32[72,128]{1,0:T(1,128)}', space=vmem, size = 0x9000, scoped, tag = 'internal scratch']
  %s0 = inlined_call_operand.vmem [shape: bf16[2,18,128], index: 0, kind: input, shape index: {}]
  %s1 = inlined_call_operand.vmem [shape: bf16[3,128,256], index: 1, kind: input, shape index: {}]
  %s2 = inlined_call_operand.vmem [shape: f32[1,256], index: 2, kind: input, shape index: {}]
  %s3 = inlined_call_operand.vmem [shape: f32[2,16,128], index: 3, kind: output, shape index: {}]
  %s4 = sld [smem:[#allocation0]]
  $region22: #{mfm_forward.1} parent=0
    _
  %s6 = ssub.s32 1, %s4
  %s7 = scalar_select 0, %s6, %s4
  // Predicated region
  $region2: #{mfm_forward.1} parent=0 // pred_check
    _
  $region3: #{mfm_forward.1} parent=0 // pred_check_branch
    %9 = sbr.rel (0) target = $region5
  $region4: #{mfm_forward.1} parent=0 // pred_region
    _
  $region5: #{mfm_forward.1} parent=0 // pred_fallthru
    _
  // Predicated region
  $region6: #{mfm_forward.1} parent=0 // pred_check
    _
  $region7: #{mfm_forward.1} parent=0 // pred_check_branch
    %11 = sbr.rel (0) target = $region9
  $region8: #{mfm_forward.1} parent=0 // pred_region
    _
  $region9: #{mfm_forward.1} parent=0 // pred_fallthru
    _
  // Predicated region
  $region10: #{mfm_forward.1} parent=0 // pred_check
    _
  $region11: #{mfm_forward.1} parent=0 // pred_check_branch
    %13 = sbr.rel (0) target = $region13
  $region12: #{mfm_forward.1} parent=0 // pred_region
    _
  $region13: #{mfm_forward.1} parent=0 // pred_fallthru
    _
  %v14 = vld [vmem:[%s0] sm:$0xf]
  %v15 = vld [vmem:[%s0 + $0x4] sm:$0xf]
  %v16 = vld [vmem:[%s0 + $0xc] sm:$0xf]
  %v17 = vld [vmem:[%s0 + $0x10] sm:$0xf]
  %v18 = vld [vmem:[%s1] sm:$0xff]
  %v19 = vld [vmem:[%s1 + $0x8] sm:$0xff]
  %v20 = vld [vmem:[%s1 + $0x10] sm:$0xff]
  %v21 = vld [vmem:[%s1 + $0x18] sm:$0xff]
  %v22 = vld [vmem:[%s1 + $0x20] sm:$0xff]
  %v23 = vld [vmem:[%s1 + $0x28] sm:$0xff]
  %v24 = vld [vmem:[%s1 + $0x30] sm:$0xff]
  %v25 = vld [vmem:[%s1 + $0x38] sm:$0xff]
  %v26 = vld [vmem:[%s1 + $0x40] sm:$0xff]
  %v27 = vld [vmem:[%s1 + $0x48] sm:$0xff]
  %v28 = vld [vmem:[%s1 + $0x50] sm:$0xff]
  %v29 = vld [vmem:[%s1 + $0x58] sm:$0xff]
  %v30 = vld [vmem:[%s1 + $0x60] sm:$0xff]
  %v31 = vld [vmem:[%s1 + $0x68] sm:$0xff]
  %v32 = vld [vmem:[%s1 + $0x70] sm:$0xff]
  %v33 = vld [vmem:[%s1 + $0x78] sm:$0xff]
  %v34 = vld [vmem:[%s0 + $0x8] sm:$0x1]
  %v35 = vld [vmem:[%s0 + $0x14] sm:$0x1]
  %vm36 = vsmask.f32 3328
  %vm37 = vsmask.f32 7440
  %vm38 = vmor %vm36, %vm37
  %v40 = vshrl.u32 %v14, 16
  %v42 = vrot.slane %v40, 4
  %v43 = vshll.u32 %v14, 16
  %v45 = vrot.slane %v43, 5
  %v46 = vor.u32 %v42, %v45
  %v47 = vrot.slane %v46, 4
  %v49 = vshll.u32 %v15, 16
  %v51 = vrot.slane %v49, 5
  %v52 = vsel %vm38, %v47, %v51
  %v53 = vshrl.u32 %v15, 16
  %v55 = vrot.slane %v53, 4
  %v56 = vor.u32 %v55, %v51
  %v57 = vrot.slane %v56, 4
  %v59 = vshll.u32 %v34, 16
  %v61 = vrot.slane %v59, 5
  %v62 = vsel %vm38, %v57, %v61
  %v64 = vshrl.u32 %v16, 16
  %v66 = vrot.slane %v64, 4
  %v67 = vshll.u32 %v16, 16
  %v69 = vrot.slane %v67, 5
  %v70 = vor.u32 %v66, %v69
  %v71 = vrot.slane %v70, 4
  %v73 = vshll.u32 %v17, 16
  %v75 = vrot.slane %v73, 5
  %v76 = vsel %vm38, %v71, %v75
  %v77 = vshrl.u32 %v17, 16
  %v79 = vrot.slane %v77, 4
  %v80 = vor.u32 %v79, %v75
  %v81 = vrot.slane %v80, 4
  %v83 = vshll.u32 %v35, 16
  %v85 = vrot.slane %v83, 5
  %v86 = vsel %vm38, %v81, %v85
  %s87 = scalar_lea.vmem %s1, 128
  %v88 = vld [vmem:[%s87] sm:$0xff]
  %v89 = vld [vmem:[%s87 + $0x8] sm:$0xff]
  %v90 = vld [vmem:[%s87 + $0x10] sm:$0xff]
  %v91 = vld [vmem:[%s87 + $0x18] sm:$0xff]
  %v92 = vld [vmem:[%s87 + $0x20] sm:$0xff]
  %v93 = vld [vmem:[%s87 + $0x28] sm:$0xff]
  %v94 = vld [vmem:[%s87 + $0x30] sm:$0xff]
  %v95 = vld [vmem:[%s87 + $0x38] sm:$0xff]
  %v96 = vld [vmem:[%s87 + $0x40] sm:$0xff]
  %v97 = vld [vmem:[%s87 + $0x48] sm:$0xff]
  %v98 = vld [vmem:[%s87 + $0x50] sm:$0xff]
  %v99 = vld [vmem:[%s87 + $0x58] sm:$0xff]
  %v100 = vld [vmem:[%s87 + $0x60] sm:$0xff]
  %v101 = vld [vmem:[%s87 + $0x68] sm:$0xff]
  %v102 = vld [vmem:[%s87 + $0x70] sm:$0xff]
  %v103 = vld [vmem:[%s87 + $0x78] sm:$0xff]
  %v104 = vunpack.c.l.b16 %v52
  %v105 = vunpack.c.l.b16 %v62
  %v106 = vunpack.c.l.b16 %v76
  %v107 = vunpack.c.l.b16 %v86
  %v108 = vpack.c.b16 %v105, %v104
  %v109 = vpack.c.b16 %v107, %v106
  %v128 = vunpack.c.l.b16 %v88
  %v129 = vunpack.c.h.b16 %v88
  %v130 = vunpack.c.l.b16 %v89
  %v131 = vunpack.c.h.b16 %v89
  %v132 = vunpack.c.l.b16 %v90
  %v133 = vunpack.c.h.b16 %v90
  %v134 = vunpack.c.l.b16 %v91
  %v135 = vunpack.c.h.b16 %v91
  %v136 = vunpack.c.l.b16 %v92
  %v137 = vunpack.c.h.b16 %v92
  %v138 = vunpack.c.l.b16 %v93
  %v139 = vunpack.c.h.b16 %v93
  %v140 = vunpack.c.l.b16 %v94
  %v141 = vunpack.c.h.b16 %v94
  %v142 = vunpack.c.l.b16 %v95
  %v143 = vunpack.c.h.b16 %v95
  %v144 = vunpack.c.l.b16 %v96
  %v145 = vunpack.c.h.b16 %v96
  %v146 = vunpack.c.l.b16 %v97
  %v147 = vunpack.c.h.b16 %v97
  %v148 = vunpack.c.l.b16 %v98
  %v149 = vunpack.c.h.b16 %v98
  %v150 = vunpack.c.l.b16 %v99
  %v151 = vunpack.c.h.b16 %v99
  %v152 = vunpack.c.l.b16 %v100
  %v153 = vunpack.c.h.b16 %v100
  %v154 = vunpack.c.l.b16 %v101
  %v155 = vunpack.c.h.b16 %v101
  %v156 = vunpack.c.l.b16 %v102
  %v157 = vunpack.c.h.b16 %v102
  %v158 = vunpack.c.l.b16 %v103
  %v159 = vunpack.c.h.b16 %v103
  %v160 = vpack.c.b16 %v130, %v128
  %v161 = vpack.c.b16 %v131, %v129
  %v162 = vpack.c.b16 %v134, %v132
  %v163 = vpack.c.b16 %v135, %v133
  %v164 = vpack.c.b16 %v138, %v136
  %v165 = vpack.c.b16 %v139, %v137
  %v166 = vpack.c.b16 %v142, %v140
  %v167 = vpack.c.b16 %v143, %v141
  %v168 = vpack.c.b16 %v146, %v144
  %v169 = vpack.c.b16 %v147, %v145
  %v170 = vpack.c.b16 %v150, %v148
  %v171 = vpack.c.b16 %v151, %v149
  %v172 = vpack.c.b16 %v154, %v152
  %v173 = vpack.c.b16 %v155, %v153
  %v174 = vpack.c.b16 %v158, %v156
  %v175 = vpack.c.b16 %v159, %v157
  %192 = vmatpush.bf16.msra.mxu0 %v174
  %193 = vmatpush.bf16.msra.mxu0 %v172
  %194 = vmatpush.bf16.msra.mxu0 %v170
  %195 = vmatpush.bf16.msra.mxu0 %v168
  %196 = vmatpush.bf16.msra.mxu0 %v166
  %197 = vmatpush.bf16.msra.mxu0 %v164
  %198 = vmatpush.bf16.msra.mxu0 %v162
  %199 = vmatpush.bf16.msra.mxu0 %v160
  %200 = vmatmul.bf16.gmra.mxu0 %v108
  %v201 = vpop.f32.mrf.mxu0
  %v202 = vadd.f32 0.0, %v201
  %v203 = vpop.f32.mrf.mxu0
  %v204 = vadd.f32 0.0, %v203
  %205 = vmatmul.bf16.gmra.mxu0 %v109
  %v206 = vpop.f32.mrf.mxu0
  %v207 = vadd.f32 0.0, %v206
  %v208 = vpop.f32.mrf.mxu0
  %v209 = vadd.f32 0.0, %v208
  %210 = vdwg.mxu0
  %211 = vmatpush.bf16.msra.mxu0 %v175
  %212 = vmatpush.bf16.msra.mxu0 %v173
  %213 = vmatpush.bf16.msra.mxu0 %v171
  %214 = vmatpush.bf16.msra.mxu0 %v169
  %215 = vmatpush.bf16.msra.mxu0 %v167
  %216 = vmatpush.bf16.msra.mxu0 %v165
  %217 = vmatpush.bf16.msra.mxu0 %v163
  %218 = vmatpush.bf16.msra.mxu0 %v161
  %219 = vmatmul.bf16.gmra.mxu0 %v108
  %v220 = vpop.f32.mrf.mxu0
  %v221 = vadd.f32 0.0, %v220
  %v222 = vpop.f32.mrf.mxu0
  %v223 = vadd.f32 0.0, %v222
  %224 = vmatmul.bf16.gmra.mxu0 %v109
  %v225 = vpop.f32.mrf.mxu0
  %v226 = vadd.f32 0.0, %v225
  %v227 = vpop.f32.mrf.mxu0
  %v228 = vadd.f32 0.0, %v227
  %229 = vdwg.mxu0
  %v234 = vunpack.c.l.b16 %v14
  %v235 = vunpack.c.l.b16 %v15
  %v236 = vunpack.c.l.b16 %v16
  %v237 = vunpack.c.l.b16 %v17
  %v238 = vpack.c.b16 %v235, %v234
  %v239 = vpack.c.b16 %v237, %v236
  %v258 = vunpack.c.l.b16 %v18
  %v259 = vunpack.c.h.b16 %v18
  %v260 = vunpack.c.l.b16 %v19
  %v261 = vunpack.c.h.b16 %v19
  %v262 = vunpack.c.l.b16 %v20
  %v263 = vunpack.c.h.b16 %v20
  %v264 = vunpack.c.l.b16 %v21
  %v265 = vunpack.c.h.b16 %v21
  %v266 = vunpack.c.l.b16 %v22
  %v267 = vunpack.c.h.b16 %v22
  %v268 = vunpack.c.l.b16 %v23
  %v269 = vunpack.c.h.b16 %v23
  %v270 = vunpack.c.l.b16 %v24
  %v271 = vunpack.c.h.b16 %v24
  %v272 = vunpack.c.l.b16 %v25
  %v273 = vunpack.c.h.b16 %v25
  %v274 = vunpack.c.l.b16 %v26
  %v275 = vunpack.c.h.b16 %v26
  %v276 = vunpack.c.l.b16 %v27
  %v277 = vunpack.c.h.b16 %v27
  %v278 = vunpack.c.l.b16 %v28
  %v279 = vunpack.c.h.b16 %v28
  %v280 = vunpack.c.l.b16 %v29
  %v281 = vunpack.c.h.b16 %v29
  %v282 = vunpack.c.l.b16 %v30
  %v283 = vunpack.c.h.b16 %v30
  %v284 = vunpack.c.l.b16 %v31
  %v285 = vunpack.c.h.b16 %v31
  %v286 = vunpack.c.l.b16 %v32
  %v287 = vunpack.c.h.b16 %v32
  %v288 = vunpack.c.l.b16 %v33
  %v289 = vunpack.c.h.b16 %v33
  %v290 = vpack.c.b16 %v260, %v258
  %v291 = vpack.c.b16 %v261, %v259
  %v292 = vpack.c.b16 %v264, %v262
  %v293 = vpack.c.b16 %v265, %v263
  %v294 = vpack.c.b16 %v268, %v266
  %v295 = vpack.c.b16 %v269, %v267
  %v296 = vpack.c.b16 %v272, %v270
  %v297 = vpack.c.b16 %v273, %v271
  %v298 = vpack.c.b16 %v276, %v274
  %v299 = vpack.c.b16 %v277, %v275
  %v300 = vpack.c.b16 %v280, %v278
  %v301 = vpack.c.b16 %v281, %v279
  %v302 = vpack.c.b16 %v284, %v282
  %v303 = vpack.c.b16 %v285, %v283
  %v304 = vpack.c.b16 %v288, %v286
  %v305 = vpack.c.b16 %v289, %v287
  %322 = vmatpush.bf16.msra.mxu0 %v304
  %323 = vmatpush.bf16.msra.mxu0 %v302
  %324 = vmatpush.bf16.msra.mxu0 %v300
  %325 = vmatpush.bf16.msra.mxu0 %v298
  %326 = vmatpush.bf16.msra.mxu0 %v296
  %327 = vmatpush.bf16.msra.mxu0 %v294
  %328 = vmatpush.bf16.msra.mxu0 %v292
  %329 = vmatpush.bf16.msra.mxu0 %v290
  %330 = vmatmul.bf16.gmra.mxu0 %v238
  %v331 = vpop.f32.mrf.mxu0
  %v332 = vadd.f32 %v202, %v331
  %v333 = vpop.f32.mrf.mxu0
  %v334 = vadd.f32 %v204, %v333
  %335 = vmatmul.bf16.gmra.mxu0 %v239
  %v336 = vpop.f32.mrf.mxu0
  %v337 = vadd.f32 %v207, %v336
  %v338 = vpop.f32.mrf.mxu0
  %v339 = vadd.f32 %v209, %v338
  %340 = vdwg.mxu0
  %341 = vmatpush.bf16.msra.mxu0 %v305
  %342 = vmatpush.bf16.msra.mxu0 %v303
  %343 = vmatpush.bf16.msra.mxu0 %v301
  %344 = vmatpush.bf16.msra.mxu0 %v299
  %345 = vmatpush.bf16.msra.mxu0 %v297
  %346 = vmatpush.bf16.msra.mxu0 %v295
  %347 = vmatpush.bf16.msra.mxu0 %v293
  %348 = vmatpush.bf16.msra.mxu0 %v291
  %349 = vmatmul.bf16.gmra.mxu0 %v238
  %v350 = vpop.f32.mrf.mxu0
  %v351 = vadd.f32 %v221, %v350
  %v352 = vpop.f32.mrf.mxu0
  %v353 = vadd.f32 %v223, %v352
  %354 = vmatmul.bf16.gmra.mxu0 %v239
  %v355 = vpop.f32.mrf.mxu0
  %v356 = vadd.f32 %v226, %v355
  %v357 = vpop.f32.mrf.mxu0
  %v358 = vadd.f32 %v228, %v357
  %359 = vdwg.mxu0
  %v360 = vld [vmem:[%s0] sm:$0xe]
  %v361 = vld [vmem:[%s0 + $0xc] sm:$0xe]
  %vm366 = vcmask 1042432
  %vm367 = vcmask 1046532
  %vm368 = vmor %vm366, %vm367
  %v369 = vrot.slane %v360, 5
  %v370 = vrot.slane %v369, 4
  %v371 = vrot.slane %v15, 5
  %v372 = vsel %vm368, %v370, %v371
  %v373 = vrot.slane %v371, 4
  %v374 = vrot.slane %v34, 5
  %v375 = vsel %vm368, %v373, %v374
  %v376 = vrot.slane %v361, 5
  %v377 = vrot.slane %v376, 4
  %v378 = vrot.slane %v17, 5
  %v379 = vsel %vm368, %v377, %v378
  %v380 = vrot.slane %v378, 4
  %v381 = vrot.slane %v35, 5
  %v382 = vsel %vm368, %v380, %v381
  %s383 = scalar_lea.vmem %s1, 256
  %v384 = vld [vmem:[%s383] sm:$0xff]
  %v385 = vld [vmem:[%s383 + $0x8] sm:$0xff]
  %v386 = vld [vmem:[%s383 + $0x10] sm:$0xff]
  %v387 = vld [vmem:[%s383 + $0x18] sm:$0xff]
  %v388 = vld [vmem:[%s383 + $0x20] sm:$0xff]
  %v389 = vld [vmem:[%s383 + $0x28] sm:$0xff]
  %v390 = vld [vmem:[%s383 + $0x30] sm:$0xff]
  %v391 = vld [vmem:[%s383 + $0x38] sm:$0xff]
  %v392 = vld [vmem:[%s383 + $0x40] sm:$0xff]
  %v393 = vld [vmem:[%s383 + $0x48] sm:$0xff]
  %v394 = vld [vmem:[%s383 + $0x50] sm:$0xff]
  %v395 = vld [vmem:[%s383 + $0x58] sm:$0xff]
  %v396 = vld [vmem:[%s383 + $0x60] sm:$0xff]
  %v397 = vld [vmem:[%s383 + $0x68] sm:$0xff]
  %v398 = vld [vmem:[%s383 + $0x70] sm:$0xff]
  %v399 = vld [vmem:[%s383 + $0x78] sm:$0xff]
  %v400 = vunpack.c.l.b16 %v372
  %v401 = vunpack.c.l.b16 %v375
  %v402 = vunpack.c.l.b16 %v379
  %v403 = vunpack.c.l.b16 %v382
  %v404 = vpack.c.b16 %v401, %v400
  %v405 = vpack.c.b16 %v403, %v402
  %v424 = vunpack.c.l.b16 %v384
  %v425 = vunpack.c.h.b16 %v384
  %v426 = vunpack.c.l.b16 %v385
  %v427 = vunpack.c.h.b16 %v385
  %v428 = vunpack.c.l.b16 %v386
  %v429 = vunpack.c.h.b16 %v386
  %v430 = vunpack.c.l.b16 %v387
  %v431 = vunpack.c.h.b16 %v387
  %v432 = vunpack.c.l.b16 %v388
  %v433 = vunpack.c.h.b16 %v388
  %v434 = vunpack.c.l.b16 %v389
  %v435 = vunpack.c.h.b16 %v389
  %v436 = vunpack.c.l.b16 %v390
  %v437 = vunpack.c.h.b16 %v390
  %v438 = vunpack.c.l.b16 %v391
  %v439 = vunpack.c.h.b16 %v391
  %v440 = vunpack.c.l.b16 %v392
  %v441 = vunpack.c.h.b16 %v392
  %v442 = vunpack.c.l.b16 %v393
  %v443 = vunpack.c.h.b16 %v393
  %v444 = vunpack.c.l.b16 %v394
  %v445 = vunpack.c.h.b16 %v394
  %v446 = vunpack.c.l.b16 %v395
  %v447 = vunpack.c.h.b16 %v395
  %v448 = vunpack.c.l.b16 %v396
  %v449 = vunpack.c.h.b16 %v396
  %v450 = vunpack.c.l.b16 %v397
  %v451 = vunpack.c.h.b16 %v397
  %v452 = vunpack.c.l.b16 %v398
  %v453 = vunpack.c.h.b16 %v398
  %v454 = vunpack.c.l.b16 %v399
  %v455 = vunpack.c.h.b16 %v399
  %v456 = vpack.c.b16 %v426, %v424
  %v457 = vpack.c.b16 %v427, %v425
  %v458 = vpack.c.b16 %v430, %v428
  %v459 = vpack.c.b16 %v431, %v429
  %v460 = vpack.c.b16 %v434, %v432
  %v461 = vpack.c.b16 %v435, %v433
  %v462 = vpack.c.b16 %v438, %v436
  %v463 = vpack.c.b16 %v439, %v437
  %v464 = vpack.c.b16 %v442, %v440
  %v465 = vpack.c.b16 %v443, %v441
  %v466 = vpack.c.b16 %v446, %v444
  %v467 = vpack.c.b16 %v447, %v445
  %v468 = vpack.c.b16 %v450, %v448
  %v469 = vpack.c.b16 %v451, %v449
  %v470 = vpack.c.b16 %v454, %v452
  %v471 = vpack.c.b16 %v455, %v453
  %488 = vmatpush.bf16.msra.mxu0 %v470
  %489 = vmatpush.bf16.msra.mxu0 %v468
  %490 = vmatpush.bf16.msra.mxu0 %v466
  %491 = vmatpush.bf16.msra.mxu0 %v464
  %492 = vmatpush.bf16.msra.mxu0 %v462
  %493 = vmatpush.bf16.msra.mxu0 %v460
  %494 = vmatpush.bf16.msra.mxu0 %v458
  %495 = vmatpush.bf16.msra.mxu0 %v456
  %496 = vmatmul.bf16.gmra.mxu0 %v404
  %v497 = vpop.f32.mrf.mxu0
  %v498 = vadd.f32 0.0, %v497
  %v499 = vpop.f32.mrf.mxu0
  %v500 = vadd.f32 0.0, %v499
  %501 = vmatmul.bf16.gmra.mxu0 %v405
  %v502 = vpop.f32.mrf.mxu0
  %v503 = vadd.f32 0.0, %v502
  %v504 = vpop.f32.mrf.mxu0
  %v505 = vadd.f32 0.0, %v504
  %506 = vdwg.mxu0
  %507 = vmatpush.bf16.msra.mxu0 %v471
  %508 = vmatpush.bf16.msra.mxu0 %v469
  %509 = vmatpush.bf16.msra.mxu0 %v467
  %510 = vmatpush.bf16.msra.mxu0 %v465
  %511 = vmatpush.bf16.msra.mxu0 %v463
  %512 = vmatpush.bf16.msra.mxu0 %v461
  %513 = vmatpush.bf16.msra.mxu0 %v459
  %514 = vmatpush.bf16.msra.mxu0 %v457
  %515 = vmatmul.bf16.gmra.mxu0 %v404
  %v516 = vpop.f32.mrf.mxu0
  %v517 = vadd.f32 0.0, %v516
  %v518 = vpop.f32.mrf.mxu0
  %v519 = vadd.f32 0.0, %v518
  %520 = vmatmul.bf16.gmra.mxu0 %v405
  %v521 = vpop.f32.mrf.mxu0
  %v522 = vadd.f32 0.0, %v521
  %v523 = vpop.f32.mrf.mxu0
  %v524 = vadd.f32 0.0, %v523
  %525 = vdwg.mxu0
  %v526 = vadd.f32 %v332, %v498
  %v527 = vadd.f32 %v351, %v517
  %v528 = vadd.f32 %v334, %v500
  %v529 = vadd.f32 %v353, %v519
  %v530 = vadd.f32 %v337, %v503
  %v531 = vadd.f32 %v356, %v522
  %v532 = vadd.f32 %v339, %v505
  %v533 = vadd.f32 %v358, %v524
  %v534 = vld [vmem:[%s2] sm:$0x3]
  %v536 = vperm.slane %v534, 0
  %v537 = vperm.slane %v534, 1
  %v540 = vadd.f32 %v526, %v536
  %v541 = vadd.f32 %v527, %v537
  %v542 = vadd.f32 %v528, %v536
  %v543 = vadd.f32 %v529, %v537
  %v544 = vadd.f32 %v530, %v536
  %v545 = vadd.f32 %v531, %v537
  %v546 = vadd.f32 %v532, %v536
  %v547 = vadd.f32 %v533, %v537
  %v548 = vmax.f32 %v540, %v541
  %v549 = vmax.f32 %v542, %v543
  %v550 = vmax.f32 %v544, %v545
  %v551 = vmax.f32 %v546, %v547
  %552 = vst [vmem:[%s3] sm:$0xff] %v548
  %553 = vst [vmem:[%s3 + $0x8] sm:$0xff] %v549
  %554 = vst [vmem:[%s3 + $0x10] sm:$0xff] %v550
  %555 = vst [vmem:[%s3 + $0x18] sm:$0xff] %v551
  // Predicated region
  $region14: #{mfm_forward.1} parent=0 // pred_check
    _
  $region15: #{mfm_forward.1} parent=0 // pred_check_branch
    %557 = sbr.rel (0) target = $region17
  $region16: #{mfm_forward.1} parent=0 // pred_region
    _
  $region17: #{mfm_forward.1} parent=0 // pred_fallthru
    _
  // Predicated region
  $region18: #{mfm_forward.1} parent=0 // pred_check
    _
  $region19: #{mfm_forward.1} parent=0 // pred_check_branch
    %559 = sbr.rel (0) target = $region21
  $region20: #{mfm_forward.1} parent=0 // pred_region
    _
  $region21: #{mfm_forward.1} parent=0 // pred_fallthru
    _

</llo_original>
